<compile_context>
chip_gen: v6e
topology: v6e:2x2x1
jax: 0.10.0
libtpu: 0.0.40
codegen_flags: <defaults>
</compile_context>

<pallas_src>
import functools

import jax
import jax.numpy as jnp
from jax.experimental import pallas as pl
from jax.experimental.pallas import tpu as pltpu


S_HID = 256   # state_features[0] output width
F_HID = 128   # feature width (state tail / action features / last hidden)


def _round_up(x, m):
    return ((x + m - 1) // m) * m


def _cdiv(a, b):
    return -(-a // b)


def critic_kernel(s_ref, a_ref,              # (TB, state_dim) f32, (TB, action_dim) f32
                  w1_ref, b1_ref,            # Linear(state_dim, 256)
                  wa_ref, ba_ref,            # Linear(action_dim, 128)
                  w2_ref, b2_ref,            # Linear(256, 128)
                  w3_ref, b3_ref,            # Linear(256, 128), weight kept unsplit
                  w4_ref, b4_ref,            # Linear(128, 1) as (1,128) row + (1,1) bias
                  out_ref):                  # (1, 1, TB) f32 lane-dense row
    s = s_ref[...].astype(jnp.bfloat16)
    a = a_ref[...].astype(jnp.bfloat16)

    # state_features[0]: Linear(state_dim, 256) + ReLU
    h1 = jnp.dot(s, w1_ref[...], preferred_element_type=jnp.float32)
    h1 = jnp.maximum(h1 + b1_ref[...], 0.0)                       # (TB, 256) f32

    # action_features[0]: Linear(action_dim, 128) + ReLU
    af = jnp.dot(a, wa_ref[...], preferred_element_type=jnp.float32)
    af = jnp.maximum(af + ba_ref[...], 0.0)                       # (TB, 128) f32

    # state_features[2]: Linear(256, 128) + ReLU
    sf = jnp.dot(h1.astype(jnp.bfloat16), w2_ref[...],
                 preferred_element_type=jnp.float32)
    sf = jnp.maximum(sf + b2_ref[...], 0.0)                       # (TB, 128) f32

    # last[0]: cat((sf, af), 1) @ W3 + b3, merged single K=256 MXU matmul.
    # The concat is 128-lane aligned -> pure vreg placement, no XLU traffic.
    sa = jnp.concatenate(
        [sf.astype(jnp.bfloat16), af.astype(jnp.bfloat16)], axis=-1)  # (TB, 256)
    h3 = jnp.dot(sa, w3_ref[...], preferred_element_type=jnp.float32) + b3_ref[...]
    h3 = jnp.maximum(h3, 0.0)                                     # (TB, 128) f32

    # last[2]: Linear(128, 1) as VPU multiply + XLU transpose/sublane-reduce,
    # producing a lane-dense (1, TB) row (keeps the MXU free, avoids lane-sparse
    # (TB, 1) masked stores).
    prod = h3 * w4_ref[...]                                       # (TB, 128) f32
    v_row = jnp.sum(prod.T, axis=0, keepdims=True) + b4_ref[...]  # (1, TB) f32
    out_ref[...] = v_row[None]                                    # (1, 1, TB)


@functools.partial(jax.jit, static_argnames=("tb",))
def critic_forward(state, action, params, *, tb=2048):
    state = state.astype(jnp.float32)      # mirrors torch .float()
    action = action.astype(jnp.float32)
    B = state.shape[0]
    sd = state.shape[1]
    ad = action.shape[1]

    # Batch tile: always a multiple of 16 (bf16 sublane packing), capped at
    # `tb`, and additionally capped at half the rounded batch so there are at
    # least 2 grid steps when possible (v7x has 2 TensorCores per chip and the
    # "parallel" batch axis shards grid steps across them).
    B16 = _round_up(B, 16)
    TB = min(_round_up(tb, 16), B16)
    TB = min(TB, max(16, _round_up(_cdiv(B16, 2), 16)))
    num_tiles = _cdiv(B16, TB)
    TB = _round_up(_cdiv(B16, num_tiles), 16)   # even out tiles, minimize padding
    Bp = TB * num_tiles

    if Bp != B:
        state = jnp.pad(state, ((0, Bp - B), (0, 0)))
        action = jnp.pad(action, ((0, Bp - B), (0, 0)))

    def const2d(i):
        return (0, 0)

    # Constant index maps -> weights/biases are DMA'd once and stay VMEM-resident.
    w_names = ("w1", "b1", "wa", "ba", "w2", "b2", "w3", "b3", "w4_row", "b4")
    w_specs = [pl.BlockSpec(params[n].shape, const2d) for n in w_names]

    flops = 2 * Bp * (sd * S_HID + ad * F_HID + 2 * S_HID * F_HID + F_HID)
    param_bytes = sum(int(p.size) * p.dtype.itemsize for p in params.values())
    bytes_accessed = Bp * (sd + ad) * 4 + Bp * 4 + param_bytes

    out = pl.pallas_call(
        critic_kernel,
        out_shape=jax.ShapeDtypeStruct((num_tiles, 1, TB), jnp.float32),
        grid_spec=pltpu.PrefetchScalarGridSpec(
            num_scalar_prefetch=0,
            grid=(num_tiles,),
            in_specs=[pl.BlockSpec((TB, sd), lambda i: (i, 0)),
                      pl.BlockSpec((TB, ad), lambda i: (i, 0))] + w_specs,
            out_specs=pl.BlockSpec((1, 1, TB), lambda i: (i, 0, 0)),
        ),
        compiler_params=pltpu.CompilerParams(
            dimension_semantics=("parallel",)),
        cost_estimate=pl.CostEstimate(
            flops=flops, transcendentals=0, bytes_accessed=bytes_accessed),
    )(state, action,
      params["w1"], params["b1"], params["wa"], params["ba"],
      params["w2"], params["b2"], params["w3"], params["b3"],
      params["w4_row"], params["b4"])

    return out.reshape(-1)[:B].reshape(B, 1)


def init_linear(key, in_f, out_f):
    """PyTorch-style init U(-1/sqrt(in), 1/sqrt(in)); weight stored (in, out)."""
    kw, kb = jax.random.split(key)
    bound = 1.0 / float(in_f) ** 0.5
    w = jax.random.uniform(kw, (in_f, out_f), jnp.float32, -bound, bound)
    b = jax.random.uniform(kb, (1, out_f), jnp.float32, -bound, bound)
    return w, b


def init_critic_params(key, state_dim, action_dim):
    k1, k2, k3, k4, k5 = jax.random.split(key, 5)
    w1, b1 = init_linear(k1, state_dim, S_HID)      # state_features[0]
    w2, b2 = init_linear(k2, S_HID, F_HID)          # state_features[2]
    wa, ba = init_linear(k3, action_dim, F_HID)     # action_features[0]
    w3, b3 = init_linear(k4, 2 * F_HID, F_HID)      # last[0] (kept unsplit, 256x128)
    w4, b4 = init_linear(k5, F_HID, 1)              # last[2]
    return dict(
        w1=w1.astype(jnp.bfloat16), b1=b1,
        wa=wa.astype(jnp.bfloat16), ba=ba,
        w2=w2.astype(jnp.bfloat16), b2=b2,
        w3=w3.astype(jnp.bfloat16), b3=b3,
        w4_row=w4.T, b4=b4,                         # (1,128) f32 row, (1,1) f32 bias
    )


def critic_reference(state, action, params):
    """Pure-JAX reference mirroring the kernel's bf16/f32 dtype path."""
    s = state.astype(jnp.float32).astype(jnp.bfloat16)
    a = action.astype(jnp.float32).astype(jnp.bfloat16)
    h1 = jnp.maximum(
        jnp.dot(s, params["w1"], preferred_element_type=jnp.float32)
        + params["b1"], 0.0)
    af = jnp.maximum(
        jnp.dot(a, params["wa"], preferred_element_type=jnp.float32)
        + params["ba"], 0.0)
    sf = jnp.maximum(
        jnp.dot(h1.astype(jnp.bfloat16), params["w2"],
                preferred_element_type=jnp.float32)
        + params["b2"], 0.0)
    sa = jnp.concatenate(
        [sf.astype(jnp.bfloat16), af.astype(jnp.bfloat16)], axis=-1)
    h3 = jnp.maximum(
        jnp.dot(sa, params["w3"], preferred_element_type=jnp.float32)
        + params["b3"], 0.0)
    return jnp.sum(h3 * params["w4_row"], axis=-1, keepdims=True) + params["b4"]


if __name__ == "__main__":
    key = jax.random.PRNGKey(0)
    k_params, k_state, k_action = jax.random.split(key, 3)

    B, STATE_DIM, ACTION_DIM = 8, 16, 8
    params = init_critic_params(k_params, STATE_DIM, ACTION_DIM)
    state = jax.random.normal(k_state, (B, STATE_DIM), jnp.float32)
    action = jax.random.normal(k_action, (B, ACTION_DIM), jnp.float32)

    v = critic_forward(state, action, params)
    v = jax.block_until_ready(v)

    v_ref = critic_reference(state, action, params)
    assert v.shape == (B, 1)
    assert jnp.allclose(v, v_ref, atol=5e-3, rtol=5e-3), (
        float(jnp.max(jnp.abs(v - v_ref))))

    print("KERNEL_OK")
</pallas_src>

<mosaic_0001>
module attributes {stable_mosaic.version = 11 : i64} {
  func.func @critic_kernel(%arg0: i32, %arg1: memref<16x16xf32, #tpu.memory_space<vmem>>, %arg2: memref<16x8xf32, #tpu.memory_space<vmem>>, %arg3: memref<16x256xbf16, #tpu.memory_space<vmem>>, %arg4: memref<1x256xf32, #tpu.memory_space<vmem>>, %arg5: memref<8x128xbf16, #tpu.memory_space<vmem>>, %arg6: memref<1x128xf32, #tpu.memory_space<vmem>>, %arg7: memref<256x128xbf16, #tpu.memory_space<vmem>>, %arg8: memref<1x128xf32, #tpu.memory_space<vmem>>, %arg9: memref<256x128xbf16, #tpu.memory_space<vmem>>, %arg10: memref<1x128xf32, #tpu.memory_space<vmem>>, %arg11: memref<1x128xf32, #tpu.memory_space<vmem>>, %arg12: memref<1x1xf32, #tpu.memory_space<vmem>>, %arg13: memref<1x1x16xf32, #tpu.memory_space<vmem>>) attributes {dimension_semantics = [#tpu.dimension_semantics<parallel>], iteration_bounds = array<i64: 1>, scalar_prefetch = 0 : i64, scratch_operands = 0 : i64, tpu.core_type = #tpu.core_type<tc>, window_params = [{transform_indices = @transform_0, window_bounds = array<i64: 16, 16>}, {transform_indices = @transform_1, window_bounds = array<i64: 16, 8>}, {pipeline_mode = #tpu.pipeline_mode<synchronous>, transform_indices = @transform_2, window_bounds = array<i64: 16, 256>}, {pipeline_mode = #tpu.pipeline_mode<synchronous>, transform_indices = @transform_3, window_bounds = array<i64: 1, 256>}, {pipeline_mode = #tpu.pipeline_mode<synchronous>, transform_indices = @transform_4, window_bounds = array<i64: 8, 128>}, {pipeline_mode = #tpu.pipeline_mode<synchronous>, transform_indices = @transform_5, window_bounds = array<i64: 1, 128>}, {pipeline_mode = #tpu.pipeline_mode<synchronous>, transform_indices = @transform_6, window_bounds = array<i64: 256, 128>}, {pipeline_mode = #tpu.pipeline_mode<synchronous>, transform_indices = @transform_7, window_bounds = array<i64: 1, 128>}, {pipeline_mode = #tpu.pipeline_mode<synchronous>, transform_indices = @transform_8, window_bounds = array<i64: 256, 128>}, {pipeline_mode = #tpu.pipeline_mode<synchronous>, transform_indices = @transform_9, window_bounds = array<i64: 1, 128>}, {pipeline_mode = #tpu.pipeline_mode<synchronous>, transform_indices = @transform_10, window_bounds = array<i64: 1, 128>}, {pipeline_mode = #tpu.pipeline_mode<synchronous>, transform_indices = @transform_11, window_bounds = array<i64: 1, 1>}, {transform_indices = @transform_12, window_bounds = array<i64: 1, 1, 16>}]} {
    %c0 = arith.constant 0 : index
    %c0_0 = arith.constant 0 : index
    %0 = vector.load %arg1[%c0, %c0_0] : memref<16x16xf32, #tpu.memory_space<vmem>>, vector<16x16xf32>
    %1 = arith.truncf %0 : vector<16x16xf32> to vector<16x16xbf16>
    %c0_1 = arith.constant 0 : index
    %c0_2 = arith.constant 0 : index
    %2 = vector.load %arg2[%c0_1, %c0_2] : memref<16x8xf32, #tpu.memory_space<vmem>>, vector<16x8xf32>
    %3 = arith.truncf %2 : vector<16x8xf32> to vector<16x8xbf16>
    %c0_3 = arith.constant 0 : index
    %c0_4 = arith.constant 0 : index
    %4 = vector.load %arg3[%c0_3, %c0_4] : memref<16x256xbf16, #tpu.memory_space<vmem>>, vector<16x256xbf16>
    %cst = arith.constant dense<0.000000e+00> : vector<16x256xf32>
    %5 = tpu.matmul %1, %4, %cst {dimension_numbers = #tpu.dot_dimension_numbers<[1], [0], [0], [1], [0, 0, 1, 1], [], []>} : vector<16x16xbf16>, vector<16x256xbf16>, vector<16x256xf32> -> vector<16x256xf32>
    %c0_5 = arith.constant 0 : index
    %c0_6 = arith.constant 0 : index
    %6 = vector.load %arg4[%c0_5, %c0_6] : memref<1x256xf32, #tpu.memory_space<vmem>>, vector<1x256xf32>
    %7 = vector.broadcast %6 : vector<1x256xf32> to vector<16x256xf32>
    %8 = arith.addf %5, %7 : vector<16x256xf32>
    %cst_7 = arith.constant 0.000000e+00 : f32
    %9 = vector.broadcast %cst_7 : f32 to vector<16x256xf32>
    %10 = arith.maximumf %8, %9 : vector<16x256xf32>
    %c0_8 = arith.constant 0 : index
    %c0_9 = arith.constant 0 : index
    %11 = vector.load %arg5[%c0_8, %c0_9] : memref<8x128xbf16, #tpu.memory_space<vmem>>, vector<8x128xbf16>
    %cst_10 = arith.constant dense<0.000000e+00> : vector<16x128xf32>
    %12 = tpu.matmul %3, %11, %cst_10 {dimension_numbers = #tpu.dot_dimension_numbers<[1], [0], [0], [1], [0, 0, 1, 1], [], []>} : vector<16x8xbf16>, vector<8x128xbf16>, vector<16x128xf32> -> vector<16x128xf32>
    %c0_11 = arith.constant 0 : index
    %c0_12 = arith.constant 0 : index
    %13 = vector.load %arg6[%c0_11, %c0_12] : memref<1x128xf32, #tpu.memory_space<vmem>>, vector<1x128xf32>
    %14 = vector.broadcast %13 : vector<1x128xf32> to vector<16x128xf32>
    %15 = arith.addf %12, %14 : vector<16x128xf32>
    %cst_13 = arith.constant 0.000000e+00 : f32
    %16 = vector.broadcast %cst_13 : f32 to vector<16x128xf32>
    %17 = arith.maximumf %15, %16 : vector<16x128xf32>
    %18 = arith.truncf %10 : vector<16x256xf32> to vector<16x256xbf16>
    %c0_14 = arith.constant 0 : index
    %c0_15 = arith.constant 0 : index
    %19 = vector.load %arg7[%c0_14, %c0_15] : memref<256x128xbf16, #tpu.memory_space<vmem>>, vector<256x128xbf16>
    %cst_16 = arith.constant dense<0.000000e+00> : vector<16x128xf32>
    %20 = tpu.matmul %18, %19, %cst_16 {dimension_numbers = #tpu.dot_dimension_numbers<[1], [0], [0], [1], [0, 0, 1, 1], [], []>} : vector<16x256xbf16>, vector<256x128xbf16>, vector<16x128xf32> -> vector<16x128xf32>
    %c0_17 = arith.constant 0 : index
    %c0_18 = arith.constant 0 : index
    %21 = vector.load %arg8[%c0_17, %c0_18] : memref<1x128xf32, #tpu.memory_space<vmem>>, vector<1x128xf32>
    %22 = vector.broadcast %21 : vector<1x128xf32> to vector<16x128xf32>
    %23 = arith.addf %20, %22 : vector<16x128xf32>
    %cst_19 = arith.constant 0.000000e+00 : f32
    %24 = vector.broadcast %cst_19 : f32 to vector<16x128xf32>
    %25 = arith.maximumf %23, %24 : vector<16x128xf32>
    %26 = arith.truncf %25 : vector<16x128xf32> to vector<16x128xbf16>
    %27 = arith.truncf %17 : vector<16x128xf32> to vector<16x128xbf16>
    %28 = tpu.concatenate %26, %27 in 1 : vector<16x128xbf16>, vector<16x128xbf16> -> vector<16x256xbf16>
    %c0_20 = arith.constant 0 : index
    %c0_21 = arith.constant 0 : index
    %29 = vector.load %arg9[%c0_20, %c0_21] : memref<256x128xbf16, #tpu.memory_space<vmem>>, vector<256x128xbf16>
    %cst_22 = arith.constant dense<0.000000e+00> : vector<16x128xf32>
    %30 = tpu.matmul %28, %29, %cst_22 {dimension_numbers = #tpu.dot_dimension_numbers<[1], [0], [0], [1], [0, 0, 1, 1], [], []>} : vector<16x256xbf16>, vector<256x128xbf16>, vector<16x128xf32> -> vector<16x128xf32>
    %c0_23 = arith.constant 0 : index
    %c0_24 = arith.constant 0 : index
    %31 = vector.load %arg10[%c0_23, %c0_24] : memref<1x128xf32, #tpu.memory_space<vmem>>, vector<1x128xf32>
    %32 = vector.broadcast %31 : vector<1x128xf32> to vector<16x128xf32>
    %33 = arith.addf %30, %32 : vector<16x128xf32>
    %cst_25 = arith.constant 0.000000e+00 : f32
    %34 = vector.broadcast %cst_25 : f32 to vector<16x128xf32>
    %35 = arith.maximumf %33, %34 : vector<16x128xf32>
    %c0_26 = arith.constant 0 : index
    %c0_27 = arith.constant 0 : index
    %36 = vector.load %arg11[%c0_26, %c0_27] : memref<1x128xf32, #tpu.memory_space<vmem>>, vector<1x128xf32>
    %37 = vector.broadcast %36 : vector<1x128xf32> to vector<16x128xf32>
    %38 = arith.mulf %35, %37 : vector<16x128xf32>
    %39 = tpu.transpose %38, [1, 0] : vector<16x128xf32> -> vector<128x16xf32>
    %cst_28 = arith.constant dense<0.000000e+00> : vector<16xf32>
    %40 = vector.multi_reduction <add>, %39, %cst_28 [0] : vector<128x16xf32> to vector<16xf32>
    %41 = vector.shape_cast %40 : vector<16xf32> to vector<1x16xf32>
    %c0_29 = arith.constant 0 : index
    %c0_30 = arith.constant 0 : index
    %42 = vector.load %arg12[%c0_29, %c0_30] : memref<1x1xf32, #tpu.memory_space<vmem>>, vector<1x1xf32>
    %43 = vector.broadcast %42 : vector<1x1xf32> to vector<1x16xf32>
    %44 = arith.addf %41, %43 : vector<1x16xf32>
    %45 = vector.shape_cast %44 : vector<1x16xf32> to vector<1x1x16xf32>
    %c0_31 = arith.constant 0 : index
    %c0_32 = arith.constant 0 : index
    %c0_33 = arith.constant 0 : index
    %46 = vector.load %arg13[%c0_31, %c0_32, %c0_33] : memref<1x1x16xf32, #tpu.memory_space<vmem>>, vector<1x1x16xf32>
    tpu.vector_store %arg13[%c0_31, %c0_32, %c0_33], %45 {strides = array<i32>} : memref<1x1x16xf32, #tpu.memory_space<vmem>>, vector<1x1x16xf32>,
    return
  }
  func.func @transform_0(%arg0: i32) -> (i32, i32) {
    %c0_i32 = arith.constant 0 : i32
    %c0_i32_0 = arith.constant 0 : i32
    return %arg0, %c0_i32 : i32, i32
  }
  func.func @transform_1(%arg0: i32) -> (i32, i32) {
    %c0_i32 = arith.constant 0 : i32
    %c0_i32_0 = arith.constant 0 : i32
    return %arg0, %c0_i32 : i32, i32
  }
  func.func @transform_2(%arg0: i32) -> (i32, i32) {
    %c0_i32 = arith.constant 0 : i32
    %c0_i32_0 = arith.constant 0 : i32
    %c0_i32_1 = arith.constant 0 : i32
    return %c0_i32, %c0_i32_0 : i32, i32
  }
  func.func @transform_3(%arg0: i32) -> (i32, i32) {
    %c0_i32 = arith.constant 0 : i32
    %c0_i32_0 = arith.constant 0 : i32
    %c0_i32_1 = arith.constant 0 : i32
    return %c0_i32, %c0_i32_0 : i32, i32
  }
  func.func @transform_4(%arg0: i32) -> (i32, i32) {
    %c0_i32 = arith.constant 0 : i32
    %c0_i32_0 = arith.constant 0 : i32
    %c0_i32_1 = arith.constant 0 : i32
    return %c0_i32, %c0_i32_0 : i32, i32
  }
  func.func @transform_5(%arg0: i32) -> (i32, i32) {
    %c0_i32 = arith.constant 0 : i32
    %c0_i32_0 = arith.constant 0 : i32
    %c0_i32_1 = arith.constant 0 : i32
    return %c0_i32, %c0_i32_0 : i32, i32
  }
  func.func @transform_6(%arg0: i32) -> (i32, i32) {
    %c0_i32 = arith.constant 0 : i32
    %c0_i32_0 = arith.constant 0 : i32
    %c0_i32_1 = arith.constant 0 : i32
    return %c0_i32, %c0_i32_0 : i32, i32
  }
  func.func @transform_7(%arg0: i32) -> (i32, i32) {
    %c0_i32 = arith.constant 0 : i32
    %c0_i32_0 = arith.constant 0 : i32
    %c0_i32_1 = arith.constant 0 : i32
    return %c0_i32, %c0_i32_0 : i32, i32
  }
  func.func @transform_8(%arg0: i32) -> (i32, i32) {
    %c0_i32 = arith.constant 0 : i32
    %c0_i32_0 = arith.constant 0 : i32
    %c0_i32_1 = arith.constant 0 : i32
    return %c0_i32, %c0_i32_0 : i32, i32
  }
  func.func @transform_9(%arg0: i32) -> (i32, i32) {
    %c0_i32 = arith.constant 0 : i32
    %c0_i32_0 = arith.constant 0 : i32
    %c0_i32_1 = arith.constant 0 : i32
    return %c0_i32, %c0_i32_0 : i32, i32
  }
  func.func @transform_10(%arg0: i32) -> (i32, i32) {
    %c0_i32 = arith.constant 0 : i32
    %c0_i32_0 = arith.constant 0 : i32
    %c0_i32_1 = arith.constant 0 : i32
    return %c0_i32, %c0_i32_0 : i32, i32
  }
  func.func @transform_11(%arg0: i32) -> (i32, i32) {
    %c0_i32 = arith.constant 0 : i32
    %c0_i32_0 = arith.constant 0 : i32
    %c0_i32_1 = arith.constant 0 : i32
    return %c0_i32, %c0_i32_0 : i32, i32
  }
  func.func @transform_12(%arg0: i32) -> (i32, i32, i32) {
    %c0_i32 = arith.constant 0 : i32
    %c0_i32_0 = arith.constant 0 : i32
    %c0_i32_1 = arith.constant 0 : i32
    return %arg0, %c0_i32, %c0_i32_0 : i32, i32, i32
  }
}

</mosaic_0001>

<llo_original>
// kernel: critic_forward.1
$region0: #{critic_forward.1}
  #allocation0 [shape = 'u32[]', space=smem, size = 0x4, offset = 0x4, fixed_abs, tag = 'smem constant byte address 0x4 - core index']
  #allocation1 [shape = 'u32[144,128]{1,0:T(1,128)}', space=vmem, size = 0x12000, scoped, tag = 'internal scratch']
  #allocation2 [shape = 'f32[1,1]{1,0:T(1,128)S(1)}', space=vmem, size = 0x200, scoped, tag = 'scoped memory for critic_forward.1']
  %s0 = inlined_call_operand.vmem [shape: f32[16,16], index: 0, kind: input, shape index: {}]
  %s1 = inlined_call_operand.vmem [shape: f32[16,8], index: 1, kind: input, shape index: {}]
  %s2 = inlined_call_operand.vmem [shape: bf16[16,256], index: 2, kind: input, shape index: {}]
  %s3 = inlined_call_operand.vmem [shape: f32[1,256], index: 3, kind: input, shape index: {}]
  %s4 = inlined_call_operand.vmem [shape: bf16[8,128], index: 4, kind: input, shape index: {}]
  %s5 = inlined_call_operand.vmem [shape: f32[1,128], index: 5, kind: input, shape index: {}]
  %s6 = inlined_call_operand.hbm [shape: bf16[256,128], index: 6, kind: input, shape index: {}]
  %s7 = inlined_call_operand.vmem [shape: f32[1,128], index: 7, kind: input, shape index: {}]
  %s8 = inlined_call_operand.hbm [shape: bf16[256,128], index: 8, kind: input, shape index: {}]
  %s9 = inlined_call_operand.vmem [shape: f32[1,128], index: 9, kind: input, shape index: {}]
  %s10 = inlined_call_operand.vmem [shape: f32[1,128], index: 10, kind: input, shape index: {}]
  %s11 = inlined_call_operand.<no memory space> [shape: f32[1,1], index: 11, kind: input, shape index: {}]
  %s12 = inlined_call_operand.vmem [shape: f32[1,1,16], index: 12, kind: output, shape index: {}]
  %s13 = sld [smem:[#allocation0]]
  $region66: #{critic_forward.1} parent=0
    _
  %s15 = ssub.s32 1, %s13
  %s16 = scalar_select 0, %s15, %s13
  %v17 = vstv %s11
  %18 = vst [vmem:[#allocation2] sm:$0x1] %v17
  $region1: #{critic_forward.1} parent=0
    #allocation3 [shape = 'u8[65536]{0}', space=vmem, size = 0x10000, scoped, tag = 'input window, operand 6, single buffered']
    #allocation4 [shape = 's32[1]{0}', space=sflag, size = 0x4, scoped, tag = 'scoped memory for critic_forward.1']
    #allocation5 [shape = 'u8[65536]{0}', space=vmem, size = 0x10000, scoped, tag = 'input window, operand 8, single buffered']
    #allocation6 [shape = 's32[1]{0}', space=sflag, size = 0x4, scoped, tag = 'scoped memory for critic_forward.1']
    %19 = vsyncpa [#allocation4], 0
    %20 = vsyncpa [#allocation6], 0
    // Predicated region
    $region2: #{critic_forward.1} parent=1 // pred_check
      _
    $region3: #{critic_forward.1} parent=1 // pred_check_branch
      %22 = sbr.rel (0) target = $region5
    $region4: #{critic_forward.1} parent=1 // pred_region
      _
    $region5: #{critic_forward.1} parent=1 // pred_fallthru
      _
    // Predicated region
    $region6: #{critic_forward.1} parent=1 // pred_check
      _
    $region7: #{critic_forward.1} parent=1 // pred_check_branch
      %24 = sbr.rel (0) target = $region9
    $region8: #{critic_forward.1} parent=1 // pred_region
      _
    $region9: #{critic_forward.1} parent=1 // pred_fallthru
      _
    // Predicated region
    $region10: #{critic_forward.1} parent=1 // pred_check
      _
    $region11: #{critic_forward.1} parent=1 // pred_check_branch
      %26 = sbr.rel (0) target = $region13
    $region12: #{critic_forward.1} parent=1 // pred_region
      _
    $region13: #{critic_forward.1} parent=1 // pred_fallthru
      _
    // Predicated region
    $region14: #{critic_forward.1} parent=1 // pred_check
      _
    $region15: #{critic_forward.1} parent=1 // pred_check_branch
      %28 = sbr.rel (0) target = $region17
    $region16: #{critic_forward.1} parent=1 // pred_region
      _
    $region17: #{critic_forward.1} parent=1 // pred_fallthru
      _
    // Predicated region
    $region18: #{critic_forward.1} parent=1 // pred_check
      _
    $region19: #{critic_forward.1} parent=1 // pred_check_branch
      %30 = sbr.rel (0) target = $region21
    $region20: #{critic_forward.1} parent=1 // pred_region
      _
    $region21: #{critic_forward.1} parent=1 // pred_fallthru
      _
    // Predicated region
    $region22: #{critic_forward.1} parent=1 // pred_check
      _
    $region23: #{critic_forward.1} parent=1 // pred_check_branch
      %32 = sbr.rel (0) target = $region25
    $region24: #{critic_forward.1} parent=1 // pred_region
      _
    $region25: #{critic_forward.1} parent=1 // pred_fallthru
      _
    // Predicated region
    $region26: #{critic_forward.1} parent=1 // pred_check
      _
    $region27: #{critic_forward.1} parent=1 // pred_check_branch
      %34 = sbr.rel (0) target = $region29
    $region28: #{critic_forward.1} parent=1 // pred_region
      %s36 = ssub.s32 2048, 2048
      %37 = vsyncadd [#allocation4], %s36
      %s38 = sshll.u32 [#allocation3], 4
      %s39 = int_to_ptr.vmem [resolvable:$true] %s38
      %44 = dma.hbm_to_vmem [thread:$0]  %s6, 2048, %s39, [#allocation4], 64, 64, 4
    $region29: #{critic_forward.1} parent=1 // pred_fallthru
      _
    // Predicated region
    $region30: #{critic_forward.1} parent=1 // pred_check
      _
    $region31: #{critic_forward.1} parent=1 // pred_check_branch
      %46 = sbr.rel (0) target = $region33
    $region32: #{critic_forward.1} parent=1 // pred_region
      _
    $region33: #{critic_forward.1} parent=1 // pred_fallthru
      _
    // Predicated region
    $region34: #{critic_forward.1} parent=1 // pred_check
      _
    $region35: #{critic_forward.1} parent=1 // pred_check_branch
      %48 = sbr.rel (0) target = $region37
    $region36: #{critic_forward.1} parent=1 // pred_region
      %s50 = ssub.s32 2048, 2048
      %51 = vsyncadd [#allocation6], %s50
      %s52 = sshll.u32 [#allocation5], 4
      %s53 = int_to_ptr.vmem [resolvable:$true] %s52
      %58 = dma.hbm_to_vmem [thread:$0]  %s8, 2048, %s53, [#allocation6], 64, 64, 4
    $region37: #{critic_forward.1} parent=1 // pred_fallthru
      _
    // Predicated region
    $region38: #{critic_forward.1} parent=1 // pred_check
      _
    $region39: #{critic_forward.1} parent=1 // pred_check_branch
      %60 = sbr.rel (0) target = $region41
    $region40: #{critic_forward.1} parent=1 // pred_region
      _
    $region41: #{critic_forward.1} parent=1 // pred_fallthru
      _
    // Predicated region
    $region42: #{critic_forward.1} parent=1 // pred_check
      _
    $region43: #{critic_forward.1} parent=1 // pred_check_branch
      %62 = sbr.rel (0) target = $region45
    $region44: #{critic_forward.1} parent=1 // pred_region
      _
    $region45: #{critic_forward.1} parent=1 // pred_fallthru
      _
    // Predicated region
    $region46: #{critic_forward.1} parent=1 // pred_check
      _
    $region47: #{critic_forward.1} parent=1 // pred_check_branch
      %64 = sbr.rel (0) target = $region49
    $region48: #{critic_forward.1} parent=1 // pred_region
      _
    $region49: #{critic_forward.1} parent=1 // pred_fallthru
      _
    // Predicated region
    $region50: #{critic_forward.1} parent=1 // pred_check
      _
    $region51: #{critic_forward.1} parent=1 // pred_check_branch
      %66 = sbr.rel (0) target = $region53
    $region52: #{critic_forward.1} parent=1 // pred_region
      %67 = dma.done [#allocation4], 2048
    $region53: #{critic_forward.1} parent=1 // pred_fallthru
      _
    // Predicated region
    $region54: #{critic_forward.1} parent=1 // pred_check
      _
    $region55: #{critic_forward.1} parent=1 // pred_check_branch
      %69 = sbr.rel (0) target = $region57
    $region56: #{critic_forward.1} parent=1 // pred_region
      %70 = dma.done [#allocation6], 2048
    $region57: #{critic_forward.1} parent=1 // pred_fallthru
      _
    %v72 = vld [vmem:[%s0] sm:$0xff]
    %v73 = vld [vmem:[%s0 + $0x8] sm:$0xff]
    %v74 = vpack.c.bf16 %v73, %v72
    %v75 = vld [vmem:[%s1] sm:$0xff]
    %v76 = vld [vmem:[%s1 + $0x8] sm:$0xff]
    %v77 = vpack.c.bf16 %v76, %v75
    %v78 = vld [vmem:[%s2] sm:$0xff]
    %v79 = vld [vmem:[%s2 + $0x8] sm:$0xff]
    %v80 = vld [vmem:[%s3] sm:$0x3]
    %v82 = vlaneseq
    %v83 = vshrl.u32 %v82, 7
    %v84 = vsub.s32 0, %v83
    %v85 = vrot.slane %v80, %v84
    %v86 = vlaneseq
    %v87 = vshrl.u32 %v86, 7
    %v88 = vsub.s32 1, %v87
    %v89 = vrot.slane %v80, %v88
    %v94 = vunpack.c.l.b16 %v78
    %v95 = vunpack.c.h.b16 %v78
    %v96 = vunpack.c.l.b16 %v79
    %v97 = vunpack.c.h.b16 %v79
    %v98 = vpack.c.b16 %v96, %v94
    %v99 = vpack.c.b16 %v97, %v95
    %vm102 = vcmask 130048
    %v104 = vsel %vm102, %v74, 0
    %106 = vmatprep.subr.bf16.mxu0 0
    %107 = vmatpush1.bf16.msra.mxu0 0
    %108 = vmatprep.subr.bf16.mxu0 0
    %109 = vmatpush1.bf16.msra.mxu0 0
    %110 = vmatprep.subr.bf16.mxu0 0
    %111 = vmatpush1.bf16.msra.mxu0 0
    %112 = vmatprep.subr.bf16.mxu0 0
    %113 = vmatpush1.bf16.msra.mxu0 0
    %114 = vmatprep.subr.bf16.mxu0 0
    %115 = vmatpush1.bf16.msra.mxu0 0
    %116 = vmatprep.subr.bf16.mxu0 0
    %117 = vmatpush1.bf16.msra.mxu0 0
    %118 = vmatprep.subr.bf16.mxu0 0
    %119 = vmatpush1.bf16.msra.mxu0 0
    %120 = vmatprep.subr.bf16.mxu0 %v99
    %121 = vmatpush1.bf16.msra.mxu0 %v98
    %122 = vmatprep.subr.bf16.mxu0 0
    %123 = vmatpush2.bf16.msra.mxu0 0
    %124 = vmatprep.subr.bf16.mxu0 0
    %125 = vmatpush2.bf16.msra.mxu0 0
    %126 = vmatprep.subr.bf16.mxu0 0
    %127 = vmatpush2.bf16.msra.mxu0 0
    %128 = vmatprep.subr.bf16.mxu0 0
    %129 = vmatpush2.bf16.msra.mxu0 0
    %130 = vmatprep.subr.bf16.mxu0 0
    %131 = vmatpush2.bf16.msra.mxu0 0
    %132 = vmatprep.subr.bf16.mxu0 0
    %133 = vmatpush2.bf16.msra.mxu0 0
    %134 = vmatprep.subr.bf16.mxu0 0
    %135 = vmatpush2.bf16.msra.mxu0 0
    %136 = vmatprep.subr.bf16.mxu0 0
    %137 = vmatpush2.bf16.msra.mxu0 0
    %138 = vmatprep.mubr.bf16.mxu0 0
    %139 = vmatmul.mubr.bf16.gmra.mxu0 %v104
    %v140 = vpop.f32.mrf.mxu0
    %v141 = vadd.f32 %v85, %v140
    %v142 = vpop.f32.mrf.mxu0
    %v143 = vadd.f32 %v89, %v142
    %v144 = vpop.f32.mrf.mxu0
    %v145 = vadd.f32 %v85, %v144
    %v146 = vpop.f32.mrf.mxu0
    %v147 = vadd.f32 %v89, %v146
    %148 = vdwg.mxu0
    %v149 = vmax.f32 %v141, 0.0
    %v150 = vmax.f32 %v143, 0.0
    %v151 = vmax.f32 %v145, 0.0
    %v152 = vmax.f32 %v147, 0.0
    %v153 = vld [vmem:[%s4] sm:$0xf]
    %v154 = vld [vmem:[%s5] sm:$0x1]
    %v156 = vlaneseq
    %v157 = vshrl.u32 %v156, 7
    %v158 = vsub.s32 0, %v157
    %v159 = vrot.slane %v154, %v158
    %vm161 = vcmask 64512
    %v163 = vsel %vm161, %v77, 0
    %vm165 = vcmask 1043456
    %v167 = vsel %vm165, %v153, 0
    %169 = vmatprep.subr.bf16.mxu0 0
    %170 = vmatpush1.bf16.msra.mxu0 0
    %171 = vmatprep.subr.bf16.mxu0 0
    %172 = vmatpush1.bf16.msra.mxu0 0
    %173 = vmatprep.subr.bf16.mxu0 0
    %174 = vmatpush1.bf16.msra.mxu0 0
    %175 = vmatprep.subr.bf16.mxu0 0
    %176 = vmatpush1.bf16.msra.mxu0 0
    %177 = vmatprep.subr.bf16.mxu0 0
    %178 = vmatpush1.bf16.msra.mxu0 0
    %179 = vmatprep.subr.bf16.mxu0 0
    %180 = vmatpush1.bf16.msra.mxu0 0
    %181 = vmatprep.subr.bf16.mxu0 0
    %182 = vmatpush1.bf16.msra.mxu0 0
    %183 = vmatprep.subr.bf16.mxu0 0
    %184 = vmatpush1.bf16.msra.mxu0 %v167
    %185 = vmatprep.subr.bf16.mxu0 0
    %186 = vmatpush2.bf16.msra.mxu0 0
    %187 = vmatprep.subr.bf16.mxu0 0
    %188 = vmatpush2.bf16.msra.mxu0 0
    %189 = vmatprep.subr.bf16.mxu0 0
    %190 = vmatpush2.bf16.msra.mxu0 0
    %191 = vmatprep.subr.bf16.mxu0 0
    %192 = vmatpush2.bf16.msra.mxu0 0
    %193 = vmatprep.subr.bf16.mxu0 0
    %194 = vmatpush2.bf16.msra.mxu0 0
    %195 = vmatprep.subr.bf16.mxu0 0
    %196 = vmatpush2.bf16.msra.mxu0 0
    %197 = vmatprep.subr.bf16.mxu0 0
    %198 = vmatpush2.bf16.msra.mxu0 0
    %199 = vmatprep.subr.bf16.mxu0 0
    %200 = vmatpush2.bf16.msra.mxu0 0
    %201 = vmatprep.mubr.bf16.mxu0 0
    %202 = vmatmul.mubr.bf16.gmra.mxu0 %v163
    %v203 = vpop.f32.mrf.mxu0
    %v204 = vadd.f32 %v159, %v203
    %v205 = vpop.f32.mrf.mxu0
    %v206 = vpop.f32.mrf.mxu0
    %v207 = vadd.f32 %v159, %v206
    %v208 = vpop.f32.mrf.mxu0
    %209 = vdwg.mxu0
    %v210 = vmax.f32 %v204, 0.0
    %v211 = vmax.f32 %v207, 0.0
    %v212 = vpack.c.bf16 %v151, %v149
    %v213 = vpack.c.bf16 %v152, %v150
    %v214 = vld [vmem:[#allocation3] sm:$0xf]
    %v215 = vld [vmem:[#allocation3 + $0x4] sm:$0xf]
    %v216 = vld [vmem:[#allocation3 + $0x8] sm:$0xf]
    %v217 = vld [vmem:[#allocation3 + $0xc] sm:$0xf]
    %v218 = vld [vmem:[#allocation3 + $0x10] sm:$0xf]
    %v219 = vld [vmem:[#allocation3 + $0x14] sm:$0xf]
    %v220 = vld [vmem:[#allocation3 + $0x18] sm:$0xf]
    %v221 = vld [vmem:[#allocation3 + $0x1c] sm:$0xf]
    %v222 = vld [vmem:[#allocation3 + $0x20] sm:$0xf]
    %v223 = vld [vmem:[#allocation3 + $0x24] sm:$0xf]
    %v224 = vld [vmem:[#allocation3 + $0x28] sm:$0xf]
    %v225 = vld [vmem:[#allocation3 + $0x2c] sm:$0xf]
    %v226 = vld [vmem:[#allocation3 + $0x30] sm:$0xf]
    %v227 = vld [vmem:[#allocation3 + $0x34] sm:$0xf]
    %v228 = vld [vmem:[#allocation3 + $0x38] sm:$0xf]
    %v229 = vld [vmem:[#allocation3 + $0x3c] sm:$0xf]
    %v230 = vld [vmem:[#allocation3 + $0x40] sm:$0xf]
    %v231 = vld [vmem:[#allocation3 + $0x44] sm:$0xf]
    %v232 = vld [vmem:[#allocation3 + $0x48] sm:$0xf]
    %v233 = vld [vmem:[#allocation3 + $0x4c] sm:$0xf]
    %v234 = vld [vmem:[#allocation3 + $0x50] sm:$0xf]
    %v235 = vld [vmem:[#allocation3 + $0x54] sm:$0xf]
    %v236 = vld [vmem:[#allocation3 + $0x58] sm:$0xf]
    %v237 = vld [vmem:[#allocation3 + $0x5c] sm:$0xf]
    %v238 = vld [vmem:[#allocation3 + $0x60] sm:$0xf]
    %v239 = vld [vmem:[#allocation3 + $0x64] sm:$0xf]
    %v240 = vld [vmem:[#allocation3 + $0x68] sm:$0xf]
    %v241 = vld [vmem:[#allocation3 + $0x6c] sm:$0xf]
    %v242 = vld [vmem:[#allocation3 + $0x70] sm:$0xf]
    %v243 = vld [vmem:[#allocation3 + $0x74] sm:$0xf]
    %v244 = vld [vmem:[#allocation3 + $0x78] sm:$0xf]
    %v245 = vld [vmem:[#allocation3 + $0x7c] sm:$0xf]
    %v246 = vld [vmem:[%s7] sm:$0x1]
    %v248 = vlaneseq
    %v249 = vshrl.u32 %v248, 7
    %v250 = vsub.s32 0, %v249
    %v251 = vrot.slane %v246, %v250
    %v285 = vunpack.c.l.b16 %v214
    %v286 = vunpack.c.l.b16 %v215
    %v287 = vunpack.c.l.b16 %v216
    %v288 = vunpack.c.l.b16 %v217
    %v289 = vunpack.c.l.b16 %v218
    %v290 = vunpack.c.l.b16 %v219
    %v291 = vunpack.c.l.b16 %v220
    %v292 = vunpack.c.l.b16 %v221
    %v293 = vunpack.c.l.b16 %v222
    %v294 = vunpack.c.l.b16 %v223
    %v295 = vunpack.c.l.b16 %v224
    %v296 = vunpack.c.l.b16 %v225
    %v297 = vunpack.c.l.b16 %v226
    %v298 = vunpack.c.l.b16 %v227
    %v299 = vunpack.c.l.b16 %v228
    %v300 = vunpack.c.l.b16 %v229
    %v301 = vunpack.c.l.b16 %v230
    %v302 = vunpack.c.l.b16 %v231
    %v303 = vunpack.c.l.b16 %v232
    %v304 = vunpack.c.l.b16 %v233
    %v305 = vunpack.c.l.b16 %v234
    %v306 = vunpack.c.l.b16 %v235
    %v307 = vunpack.c.l.b16 %v236
    %v308 = vunpack.c.l.b16 %v237
    %v309 = vunpack.c.l.b16 %v238
    %v310 = vunpack.c.l.b16 %v239
    %v311 = vunpack.c.l.b16 %v240
    %v312 = vunpack.c.l.b16 %v241
    %v313 = vunpack.c.l.b16 %v242
    %v314 = vunpack.c.l.b16 %v243
    %v315 = vunpack.c.l.b16 %v244
    %v316 = vunpack.c.l.b16 %v245
    %v317 = vpack.c.b16 %v286, %v285
    %v318 = vpack.c.b16 %v288, %v287
    %v319 = vpack.c.b16 %v290, %v289
    %v320 = vpack.c.b16 %v292, %v291
    %v321 = vpack.c.b16 %v294, %v293
    %v322 = vpack.c.b16 %v296, %v295
    %v323 = vpack.c.b16 %v298, %v297
    %v324 = vpack.c.b16 %v300, %v299
    %v325 = vpack.c.b16 %v302, %v301
    %v326 = vpack.c.b16 %v304, %v303
    %v327 = vpack.c.b16 %v306, %v305
    %v328 = vpack.c.b16 %v308, %v307
    %v329 = vpack.c.b16 %v310, %v309
    %v330 = vpack.c.b16 %v312, %v311
    %v331 = vpack.c.b16 %v314, %v313
    %v332 = vpack.c.b16 %v316, %v315
    %349 = vmatprep.subr.bf16.mxu0 0
    %350 = vmatpush1.bf16.msra.mxu0 %v324
    %351 = vmatprep.subr.bf16.mxu0 0
    %352 = vmatpush1.bf16.msra.mxu0 %v323
    %353 = vmatprep.subr.bf16.mxu0 0
    %354 = vmatpush1.bf16.msra.mxu0 %v322
    %355 = vmatprep.subr.bf16.mxu0 0
    %356 = vmatpush1.bf16.msra.mxu0 %v321
    %357 = vmatprep.subr.bf16.mxu0 0
    %358 = vmatpush1.bf16.msra.mxu0 %v320
    %359 = vmatprep.subr.bf16.mxu0 0
    %360 = vmatpush1.bf16.msra.mxu0 %v319
    %361 = vmatprep.subr.bf16.mxu0 0
    %362 = vmatpush1.bf16.msra.mxu0 %v318
    %363 = vmatprep.subr.bf16.mxu0 0
    %364 = vmatpush1.bf16.msra.mxu0 %v317
    %365 = vmatprep.subr.bf16.mxu0 0
    %366 = vmatpush2.bf16.msra.mxu0 %v332
    %367 = vmatprep.subr.bf16.mxu0 0
    %368 = vmatpush2.bf16.msra.mxu0 %v331
    %369 = vmatprep.subr.bf16.mxu0 0
    %370 = vmatpush2.bf16.msra.mxu0 %v330
    %371 = vmatprep.subr.bf16.mxu0 0
    %372 = vmatpush2.bf16.msra.mxu0 %v329
    %373 = vmatprep.subr.bf16.mxu0 0
    %374 = vmatpush2.bf16.msra.mxu0 %v328
    %375 = vmatprep.subr.bf16.mxu0 0
    %376 = vmatpush2.bf16.msra.mxu0 %v327
    %377 = vmatprep.subr.bf16.mxu0 0
    %378 = vmatpush2.bf16.msra.mxu0 %v326
    %379 = vmatprep.subr.bf16.mxu0 0
    %380 = vmatpush2.bf16.msra.mxu0 %v325
    %381 = vmatprep.mubr.bf16.mxu0 %v213
    %382 = vmatmul.mubr.bf16.gmra.mxu0 %v212
    %v383 = vpop.f32.mrf.mxu0
    %v384 = vadd.f32 %v251, %v383
    %v385 = vpop.f32.mrf.mxu0
    %v386 = vpop.f32.mrf.mxu0
    %v387 = vadd.f32 %v251, %v386
    %v388 = vpop.f32.mrf.mxu0
    %389 = vdwg.mxu0
    %v390 = vmax.f32 %v384, 0.0
    %v391 = vmax.f32 %v387, 0.0
    %v392 = vpack.c.bf16 %v391, %v390
    %v393 = vpack.c.bf16 %v211, %v210
    %v394 = vld [vmem:[#allocation5] sm:$0xf]
    %v395 = vld [vmem:[#allocation5 + $0x4] sm:$0xf]
    %v396 = vld [vmem:[#allocation5 + $0x8] sm:$0xf]
    %v397 = vld [vmem:[#allocation5 + $0xc] sm:$0xf]
    %v398 = vld [vmem:[#allocation5 + $0x10] sm:$0xf]
    %v399 = vld [vmem:[#allocation5 + $0x14] sm:$0xf]
    %v400 = vld [vmem:[#allocation5 + $0x18] sm:$0xf]
    %v401 = vld [vmem:[#allocation5 + $0x1c] sm:$0xf]
    %v402 = vld [vmem:[#allocation5 + $0x20] sm:$0xf]
    %v403 = vld [vmem:[#allocation5 + $0x24] sm:$0xf]
    %v404 = vld [vmem:[#allocation5 + $0x28] sm:$0xf]
    %v405 = vld [vmem:[#allocation5 + $0x2c] sm:$0xf]
    %v406 = vld [vmem:[#allocation5 + $0x30] sm:$0xf]
    %v407 = vld [vmem:[#allocation5 + $0x34] sm:$0xf]
    %v408 = vld [vmem:[#allocation5 + $0x38] sm:$0xf]
    %v409 = vld [vmem:[#allocation5 + $0x3c] sm:$0xf]
    %v410 = vld [vmem:[#allocation5 + $0x40] sm:$0xf]
    %v411 = vld [vmem:[#allocation5 + $0x44] sm:$0xf]
    %v412 = vld [vmem:[#allocation5 + $0x48] sm:$0xf]
    %v413 = vld [vmem:[#allocation5 + $0x4c] sm:$0xf]
    %v414 = vld [vmem:[#allocation5 + $0x50] sm:$0xf]
    %v415 = vld [vmem:[#allocation5 + $0x54] sm:$0xf]
    %v416 = vld [vmem:[#allocation5 + $0x58] sm:$0xf]
    %v417 = vld [vmem:[#allocation5 + $0x5c] sm:$0xf]
    %v418 = vld [vmem:[#allocation5 + $0x60] sm:$0xf]
    %v419 = vld [vmem:[#allocation5 + $0x64] sm:$0xf]
    %v420 = vld [vmem:[#allocation5 + $0x68] sm:$0xf]
    %v421 = vld [vmem:[#allocation5 + $0x6c] sm:$0xf]
    %v422 = vld [vmem:[#allocation5 + $0x70] sm:$0xf]
    %v423 = vld [vmem:[#allocation5 + $0x74] sm:$0xf]
    %v424 = vld [vmem:[#allocation5 + $0x78] sm:$0xf]
    %v425 = vld [vmem:[#allocation5 + $0x7c] sm:$0xf]
    %v426 = vld [vmem:[%s9] sm:$0x1]
    %v428 = vlaneseq
    %v429 = vshrl.u32 %v428, 7
    %v430 = vsub.s32 0, %v429
    %v431 = vrot.slane %v426, %v430
    %v465 = vunpack.c.l.b16 %v394
    %v466 = vunpack.c.l.b16 %v395
    %v467 = vunpack.c.l.b16 %v396
    %v468 = vunpack.c.l.b16 %v397
    %v469 = vunpack.c.l.b16 %v398
    %v470 = vunpack.c.l.b16 %v399
    %v471 = vunpack.c.l.b16 %v400
    %v472 = vunpack.c.l.b16 %v401
    %v473 = vunpack.c.l.b16 %v402
    %v474 = vunpack.c.l.b16 %v403
    %v475 = vunpack.c.l.b16 %v404
    %v476 = vunpack.c.l.b16 %v405
    %v477 = vunpack.c.l.b16 %v406
    %v478 = vunpack.c.l.b16 %v407
    %v479 = vunpack.c.l.b16 %v408
    %v480 = vunpack.c.l.b16 %v409
    %v481 = vunpack.c.l.b16 %v410
    %v482 = vunpack.c.l.b16 %v411
    %v483 = vunpack.c.l.b16 %v412
    %v484 = vunpack.c.l.b16 %v413
    %v485 = vunpack.c.l.b16 %v414
    %v486 = vunpack.c.l.b16 %v415
    %v487 = vunpack.c.l.b16 %v416
    %v488 = vunpack.c.l.b16 %v417
    %v489 = vunpack.c.l.b16 %v418
    %v490 = vunpack.c.l.b16 %v419
    %v491 = vunpack.c.l.b16 %v420
    %v492 = vunpack.c.l.b16 %v421
    %v493 = vunpack.c.l.b16 %v422
    %v494 = vunpack.c.l.b16 %v423
    %v495 = vunpack.c.l.b16 %v424
    %v496 = vunpack.c.l.b16 %v425
    %v497 = vpack.c.b16 %v466, %v465
    %v498 = vpack.c.b16 %v468, %v467
    %v499 = vpack.c.b16 %v470, %v469
    %v500 = vpack.c.b16 %v472, %v471
    %v501 = vpack.c.b16 %v474, %v473
    %v502 = vpack.c.b16 %v476, %v475
    %v503 = vpack.c.b16 %v478, %v477
    %v504 = vpack.c.b16 %v480, %v479
    %v505 = vpack.c.b16 %v482, %v481
    %v506 = vpack.c.b16 %v484, %v483
    %v507 = vpack.c.b16 %v486, %v485
    %v508 = vpack.c.b16 %v488, %v487
    %v509 = vpack.c.b16 %v490, %v489
    %v510 = vpack.c.b16 %v492, %v491
    %v511 = vpack.c.b16 %v494, %v493
    %v512 = vpack.c.b16 %v496, %v495
    %529 = vmatprep.subr.bf16.mxu0 0
    %530 = vmatpush1.bf16.msra.mxu0 %v504
    %531 = vmatprep.subr.bf16.mxu0 0
    %532 = vmatpush1.bf16.msra.mxu0 %v503
    %533 = vmatprep.subr.bf16.mxu0 0
    %534 = vmatpush1.bf16.msra.mxu0 %v502
    %535 = vmatprep.subr.bf16.mxu0 0
    %536 = vmatpush1.bf16.msra.mxu0 %v501
    %537 = vmatprep.subr.bf16.mxu0 0
    %538 = vmatpush1.bf16.msra.mxu0 %v500
    %539 = vmatprep.subr.bf16.mxu0 0
    %540 = vmatpush1.bf16.msra.mxu0 %v499
    %541 = vmatprep.subr.bf16.mxu0 0
    %542 = vmatpush1.bf16.msra.mxu0 %v498
    %543 = vmatprep.subr.bf16.mxu0 0
    %544 = vmatpush1.bf16.msra.mxu0 %v497
    %545 = vmatprep.subr.bf16.mxu0 0
    %546 = vmatpush2.bf16.msra.mxu0 %v512
    %547 = vmatprep.subr.bf16.mxu0 0
    %548 = vmatpush2.bf16.msra.mxu0 %v511
    %549 = vmatprep.subr.bf16.mxu0 0
    %550 = vmatpush2.bf16.msra.mxu0 %v510
    %551 = vmatprep.subr.bf16.mxu0 0
    %552 = vmatpush2.bf16.msra.mxu0 %v509
    %553 = vmatprep.subr.bf16.mxu0 0
    %554 = vmatpush2.bf16.msra.mxu0 %v508
    %555 = vmatprep.subr.bf16.mxu0 0
    %556 = vmatpush2.bf16.msra.mxu0 %v507
    %557 = vmatprep.subr.bf16.mxu0 0
    %558 = vmatpush2.bf16.msra.mxu0 %v506
    %559 = vmatprep.subr.bf16.mxu0 0
    %560 = vmatpush2.bf16.msra.mxu0 %v505
    %561 = vmatprep.mubr.bf16.mxu0 %v393
    %562 = vmatmul.mubr.bf16.gmra.mxu0 %v392
    %v563 = vpop.f32.mrf.mxu0
    %v564 = vadd.f32 %v431, %v563
    %v565 = vpop.f32.mrf.mxu0
    %v566 = vpop.f32.mrf.mxu0
    %v567 = vadd.f32 %v431, %v566
    %v568 = vpop.f32.mrf.mxu0
    %569 = vdwg.mxu0
    %v570 = vmax.f32 %v564, 0.0
    %v571 = vmax.f32 %v567, 0.0
    %v572 = vld [vmem:[%s10] sm:$0x1]
    %v574 = vlaneseq
    %v575 = vshrl.u32 %v574, 7
    %v576 = vsub.s32 0, %v575
    %v577 = vrot.slane %v572, %v576
    %v579 = vmul.f32 %v570, %v577
    %v580 = vmul.f32 %v571, %v577
    %581 = vxpose.xlu0.b32.start [1/16] %v579, 128
    %582 = vxpose.xlu0.b32.cont [2/16] %v580, 128
    %583 = vxpose.xlu0.b32.cont [3/16] 0.0, 128
    %584 = vxpose.xlu0.b32.cont [4/16] 0.0, 128
    %585 = vxpose.xlu0.b32.cont [5/16] 0.0, 128
    %586 = vxpose.xlu0.b32.cont [6/16] 0.0, 128
    %587 = vxpose.xlu0.b32.cont [7/16] 0.0, 128
    %588 = vxpose.xlu0.b32.cont [8/16] 0.0, 128
    %589 = vxpose.xlu0.b32.cont [9/16] 0.0, 128
    %590 = vxpose.xlu0.b32.cont [10/16] 0.0, 128
    %591 = vxpose.xlu0.b32.cont [11/16] 0.0, 128
    %592 = vxpose.xlu0.b32.cont [12/16] 0.0, 128
    %593 = vxpose.xlu0.b32.cont [13/16] 0.0, 128
    %594 = vxpose.xlu0.b32.cont [14/16] 0.0, 128
    %595 = vxpose.xlu0.b32.cont [15/16] 0.0, 128
    %596 = vxpose.xlu0.b32.end [16/16] 0.0, 128
    %v597 = vpop.trf.xlu0
    %v598 = vpop.trf.xlu0
    %v599 = vpop.trf.xlu0
    %v600 = vpop.trf.xlu0
    %v601 = vpop.trf.xlu0
    %v602 = vpop.trf.xlu0
    %v603 = vpop.trf.xlu0
    %v604 = vpop.trf.xlu0
    %v605 = vpop.trf.xlu0
    %v606 = vpop.trf.xlu0
    %v607 = vpop.trf.xlu0
    %v608 = vpop.trf.xlu0
    %v609 = vpop.trf.xlu0
    %v610 = vpop.trf.xlu0
    %v611 = vpop.trf.xlu0
    %v612 = vpop.trf.xlu0
    %v613 = vsel %vm102, %v597, 0.0
    %v614 = vsel %vm102, %v598, 0.0
    %v615 = vadd.f32 %v613, %v614
    %v616 = vsel %vm102, %v599, 0.0
    %v617 = vadd.f32 %v615, %v616
    %v618 = vsel %vm102, %v600, 0.0
    %v619 = vadd.f32 %v617, %v618
    %v620 = vsel %vm102, %v601, 0.0
    %v621 = vadd.f32 %v619, %v620
    %v622 = vsel %vm102, %v602, 0.0
    %v623 = vadd.f32 %v621, %v622
    %v624 = vsel %vm102, %v603, 0.0
    %v625 = vadd.f32 %v623, %v624
    %v626 = vsel %vm102, %v604, 0.0
    %v627 = vadd.f32 %v625, %v626
    %v628 = vsel %vm102, %v605, 0.0
    %v629 = vadd.f32 %v627, %v628
    %v630 = vsel %vm102, %v606, 0.0
    %v631 = vadd.f32 %v629, %v630
    %v632 = vsel %vm102, %v607, 0.0
    %v633 = vadd.f32 %v631, %v632
    %v634 = vsel %vm102, %v608, 0.0
    %v635 = vadd.f32 %v633, %v634
    %v636 = vsel %vm102, %v609, 0.0
    %v637 = vadd.f32 %v635, %v636
    %v638 = vsel %vm102, %v610, 0.0
    %v639 = vadd.f32 %v637, %v638
    %v640 = vsel %vm102, %v611, 0.0
    %v641 = vadd.f32 %v639, %v640
    %v642 = vsel %vm102, %v612, 0.0
    %v643 = vadd.f32 %v641, %v642
    %v644 = vrot.slane %v643, 4
    %v645 = vadd.f32 %v643, %v644
    %v646 = vrot.slane %v645, 2
    %v647 = vadd.f32 %v645, %v646
    %v648 = vrot.slane %v647, 1
    %v649 = vadd.f32 %v647, %v648
    %v650 = vld [vmem:[#allocation2] sm:$0x1]
    %652 = vset.pattern.permute.xlu0 0
    %653 = vperm.xlu0 %652, %v650
    %v654 = vpop.permute.xlu0 %653
    %v656 = vlaneseq
    %v657 = vshrl.u32 %v656, 7
    %v658 = vsub.s32 0, %v657
    %v659 = vrot.slane %v654, %v658
    %v660 = vadd.f32 %v649, %v659
    %vm661 = vcmask 122880
    %662 = vst.msk [vmem:[%s12] sm:$0x1] %vm661, %v660
    // Predicated region
    $region58: #{critic_forward.1} parent=1 // pred_check
      _
    $region59: #{critic_forward.1} parent=1 // pred_check_branch
      %664 = sbr.rel (0) target = $region61
    $region60: #{critic_forward.1} parent=1 // pred_region
      _
    $region61: #{critic_forward.1} parent=1 // pred_fallthru
      _
    // Predicated region
    $region62: #{critic_forward.1} parent=1 // pred_check
      _
    $region63: #{critic_forward.1} parent=1 // pred_check_branch
      %666 = sbr.rel (0) target = $region65
    $region64: #{critic_forward.1} parent=1 // pred_region
      _
    $region65: #{critic_forward.1} parent=1 // pred_fallthru
      _
    %667 = vsyncpa [#allocation4], 1
    %668 = vsyncpa [#allocation6], 1

</llo_original>
